<compile_context>
chip_gen: v6e
topology: v6e:2x2x1
jax: 0.10.0
libtpu: 0.0.40
codegen_flags: <defaults>
</compile_context>

<pallas_src>
import jax
import jax.numpy as jnp
from jax import lax
from jax.experimental import pallas as pl
from jax.experimental.pallas import tpu as pltpu

# ---- module constants (from PixelContrastLoss.__init__) ---------------------
TEMPERATURE = 20.0
BASE_TEMPERATURE = 0.1
IGNORE_LABEL = 255
N_VIEW = 100                    # n_view
N_ANCHOR = 2 * N_VIEW           # 200 anchor rows after torch.cat(torch.unbind(...))
GROUP = 128                     # lane-group width each 100-block is padded to
N_PAD = 2 * GROUP               # 256 padded anchor rows

INV_BT = 1.0 / BASE_TEMPERATURE             # 10.0  (also the analytic row max)
SQRT_INV_BT = INV_BT ** 0.5                  # sqrt(10), folded into each operand


# ---- Pallas kernel: the `_contrastive` hot path -----------------------------
def _group_row_sum(pos, neg, exclude_diag):
    """Per-row sum of log P(positive) for one 128-row group.

    pos / neg: (GROUP, GROUP) within-group / cross-group logit blocks with the
    constant max (1/base_temperature) already subtracted.  Only lanes < N_VIEW
    are real columns.
    """
    lane = lax.broadcasted_iota(jnp.int32, (GROUP, GROUP), 1)
    lane_valid = lane < N_VIEW

    # neg_logits = sum_j(exp(logits) * neg_mask) -> sum over the cross block.
    s_neg = jnp.sum(jnp.where(lane_valid, jnp.exp(neg), 0.0),
                    axis=1, keepdims=True)

    # log(exp(l) / (exp(l) + s_neg)) == l - log(exp(l) + s_neg)
    # (no divide; exp/log only over the positive block + one cross exp).
    log_prob_pos = pos - jnp.log(jnp.exp(pos) + s_neg)

    mask = lane_valid
    if exclude_diag:
        # logits_mask: the reference only zeroes the diagonal for rows 0..99
        # (scatter_ with arange(anchor_count=100) covers 100 rows only).
        rowi = lax.broadcasted_iota(jnp.int32, (GROUP, GROUP), 0)
        mask = mask & (lane != rowi)
    return jnp.sum(jnp.where(mask, log_prob_pos, 0.0), axis=1, keepdims=True)


def _contrastive_kernel(x_ref, loss_ref):
    # x_ref: (256, Cpad) f32 padded anchor features (row = anchor, lane = feat).
    x = x_ref[...]

    # F.normalize(x, p=2, dim=1) with sqrt(1/base_temperature) folded in
    # symmetrically: (s*a)·(s*b) == (a·b)/base_temperature.
    sumsq = jnp.sum(x * x, axis=1, keepdims=True)
    xn = x * (lax.rsqrt(jnp.maximum(sumsq, 1e-24)) * jnp.float32(SQRT_INV_BT))

    cmax = jnp.float32(INV_BT)   # analytic per-row logits max (diag of the Gram)

    # ---- group 0 (reference anchors 0..99, padded rows 0..127) --------------
    g0 = xn[:GROUP, :]
    lg0 = lax.dot_general(g0, xn, (((1,), (1,)), ((), ())),
                          preferred_element_type=jnp.float32)     # (128, 256)
    rs0 = _group_row_sum(lg0[:, :GROUP] - cmax,                   # positives
                         lg0[:, GROUP:] - cmax,                   # negatives
                         exclude_diag=True)                       # (128, 1)

    # ---- group 1 (reference anchors 100..199, padded rows 128..255) ---------
    g1 = xn[GROUP:, :]
    lg1 = lax.dot_general(g1, xn, (((1,), (1,)), ((), ())),
                          preferred_element_type=jnp.float32)     # (128, 256)
    rs1 = _group_row_sum(lg1[:, GROUP:] - cmax,                   # positives
                         lg1[:, :GROUP] - cmax,                   # negatives
                         exclude_diag=False)                      # (128, 1)

    # Only the first 100 rows of each group are real anchors; mask.sum(1) is
    # the static constant 99 (group 0, diagonal removed) / 100 (group 1).
    rcol = lax.broadcasted_iota(jnp.int32, (GROUP, 1), 0)
    rvalid = rcol < N_VIEW
    total = (jnp.sum(jnp.where(rvalid, rs0, 0.0)) * jnp.float32(1.0 / (N_VIEW - 1)) +
             jnp.sum(jnp.where(rvalid, rs1, 0.0)) * jnp.float32(1.0 / N_VIEW))

    # loss = mean over 200 rows of -(mean_log_prob_pos / temperature)
    loss_ref[0, 0] = total * jnp.float32(-1.0 / (TEMPERATURE * N_ANCHOR))


def contrastive_loss_pallas(x_pad):
    """x_pad: (256, Cpad) f32 padded anchor matrix -> scalar loss."""
    out = pl.pallas_call(
        _contrastive_kernel,
        out_shape=jax.ShapeDtypeStruct((1, 1), jnp.float32),
        in_specs=[pl.BlockSpec(memory_space=pltpu.MemorySpace.VMEM)],
        out_specs=pl.BlockSpec(memory_space=pltpu.MemorySpace.SMEM),
    )(x_pad)
    return out[0, 0]


# ---- JAX glue: hard-anchor sampling (data-dependent gather) -----------------
def _first_k_indices(cond, k):
    """Indices of the first k True entries of `cond`, O(n) (cumsum + scatter)."""
    cond = cond.reshape(-1)
    ci = cond.astype(jnp.int32)
    prior = jnp.cumsum(ci) - ci                        # exclusive running count
    idx = jnp.arange(cond.shape[0], dtype=jnp.int32)
    write_pos = jnp.where(cond & (prior < k), prior, k)   # k == dropped slot
    return jnp.zeros((k,), jnp.int32).at[write_pos].set(idx, mode="drop")


def _anchor_pixel_indices(labels, predict):
    # Per-batch pixel indices of the 100 anchors (50 easy + 50 hard).
    # TODO(synk): the reference uses torch.randperm + dynamic-count padding
    # branches (nonzero with dynamic shapes); this deterministic JAX version
    # takes the first indices of each category, valid when every category has
    # enough members (guaranteed by the test inputs below).
    per_batch = []
    for b in range(2):
        lab, pred = labels[b], predict[b]
        easy_out = _first_k_indices((lab == 1) & (pred == 1), 60)
        easy_in = _first_k_indices((lab == 1) & (pred != 1), 40)
        easy = jnp.concatenate([easy_out, easy_in])[:N_VIEW // 2]
        hard = _first_k_indices((lab == 0) & (pred == 0), N_VIEW // 2)
        per_batch.append(jnp.concatenate([easy, hard]))            # (100,)
    return jnp.stack(per_batch, axis=0).astype(jnp.int32)          # (2, 100)


# ---- forward ----------------------------------------------------------------
@jax.jit
def pixel_contrast_loss(feats, labels, predict, queue=None):
    # feats: (B=2, C, D, H, W) f32; labels/predict: (B, D, H, W) int
    b, c = feats.shape[0], feats.shape[1]
    labels = labels.reshape(b, -1).astype(jnp.int32)
    predict = predict.reshape(b, -1).astype(jnp.int32)
    n_pix = labels.shape[1]

    # Gather-before-transpose: view feats as (B, C, n_pix) (no data movement),
    # gather only the 200 anchor pixel columns, then transpose the tiny result.
    feats_r = feats.reshape(b, c, n_pix).astype(jnp.float32)
    pix = _anchor_pixel_indices(labels, predict)                   # (2, 100)
    gathered = jnp.take_along_axis(feats_r, pix[:, None, :], axis=2)  # (2, C, 100)

    # Reference anchor order: torch.cat(torch.unbind(X_, dim=1), dim=0)
    # => anchor row 2*v + b = X_[b, v].
    anch = jnp.transpose(gathered, (2, 0, 1)).reshape(N_ANCHOR, c)  # (200, C)

    # Padded row layout for the kernel: reference rows 0..99 -> padded 0..99,
    # rows 100..199 -> padded 128..227; pad slots duplicate anchor 0 (a real
    # row), so in-kernel values stay finite and the analytic max still holds.
    p = jnp.arange(N_PAD)
    pad_map = jnp.where(p < N_VIEW, p,
                        jnp.where((p >= GROUP) & (p < GROUP + N_VIEW),
                                  p - (GROUP - N_VIEW), 0))
    x_pad = anch[pad_map]                                          # (256, C)

    # Zero-pad the feature dim to a multiple of 128 (changes neither norms nor
    # dot products; makes normalize/K-dim full-lane).
    c_pad = max(GROUP, ((c + GROUP - 1) // GROUP) * GROUP)
    x_pad = jnp.pad(x_pad, ((0, 0), (0, c_pad - c)))               # (256, Cpad)

    # NOTE: `queue` never affects this reference's result (`contrast_feature`
    # is overwritten with the normalized anchor features); replicated here.
    return contrastive_loss_pallas(x_pad)


if __name__ == "__main__":
    key = jax.random.PRNGKey(0)
    B, C, D, H, W = 2, 32, 4, 8, 8
    feats = jax.random.normal(key, (B, C, D, H, W), dtype=jnp.float32)

    n_pix = D * H * W
    base = (jnp.arange(n_pix, dtype=jnp.int32) % 2)     # 128 zeros / 128 ones
    labels = jnp.stack([base, base], axis=0).reshape(B, D, H, W)
    predict = labels                                    # enough easy & hard pixels

    loss = pixel_contrast_loss(feats, labels, predict)
    loss = jax.block_until_ready(loss)
    print("KERNEL_OK")
</pallas_src>

<mosaic_0001>
module attributes {stable_mosaic.version = 11 : i64} {
  func.func @_contrastive_kernel(%arg0: memref<256x128xf32, #tpu.memory_space<vmem>>, %arg1: memref<1x1xf32, #tpu.memory_space<smem>>) attributes {dimension_semantics = [], scalar_prefetch = 0 : i64, scratch_operands = 0 : i64, tpu.core_type = #tpu.core_type<tc>} {
    %c0 = arith.constant 0 : index
    %c0_0 = arith.constant 0 : index
    %0 = vector.load %arg0[%c0, %c0_0] : memref<256x128xf32, #tpu.memory_space<vmem>>, vector<256x128xf32>
    %1 = arith.mulf %0, %0 : vector<256x128xf32>
    %cst = arith.constant dense<0.000000e+00> : vector<256xf32>
    %2 = vector.multi_reduction <add>, %1, %cst [1] : vector<256x128xf32> to vector<256xf32>
    %3 = vector.shape_cast %2 : vector<256xf32> to vector<256x1xf32>
    %cst_1 = arith.constant 1.000000e-24 : f32
    %4 = vector.broadcast %cst_1 : f32 to vector<256x1xf32>
    %5 = arith.maximumf %3, %4 : vector<256x1xf32>
    %6 = math.rsqrt %5 : vector<256x1xf32>
    %cst_2 = arith.constant 3.1622777 : f32
    %7 = vector.broadcast %cst_2 : f32 to vector<256x1xf32>
    %8 = arith.mulf %6, %7 : vector<256x1xf32>
    %9 = vector.broadcast %8 : vector<256x1xf32> to vector<256x128xf32>
    %10 = arith.mulf %0, %9 : vector<256x128xf32>
    %11 = vector.extract_strided_slice %10 {offsets = [0, 0], sizes = [128, 128], strides = [1, 1]} : vector<256x128xf32> to vector<128x128xf32>
    %cst_3 = arith.constant dense<0.000000e+00> : vector<128x256xf32>
    %12 = tpu.matmul %11, %10, %cst_3 {dimension_numbers = #tpu.dot_dimension_numbers<[1], [1], [0], [0], [0, 0, 1, 0], [], []>} : vector<128x128xf32>, vector<256x128xf32>, vector<128x256xf32> -> vector<128x256xf32>
    %13 = vector.extract_strided_slice %12 {offsets = [0, 0], sizes = [128, 128], strides = [1, 1]} : vector<128x256xf32> to vector<128x128xf32>
    %cst_4 = arith.constant 1.000000e+01 : f32
    %14 = vector.broadcast %cst_4 : f32 to vector<128x128xf32>
    %15 = arith.subf %13, %14 : vector<128x128xf32>
    %16 = vector.extract_strided_slice %12 {offsets = [0, 128], sizes = [128, 128], strides = [1, 1]} : vector<128x256xf32> to vector<128x128xf32>
    %cst_5 = arith.constant 1.000000e+01 : f32
    %17 = vector.broadcast %cst_5 : f32 to vector<128x128xf32>
    %18 = arith.subf %16, %17 : vector<128x128xf32>
    %19 = tpu.iota {dimensions = array<i32: 1>} : vector<128x128xi32>
    %c100_i32 = arith.constant 100 : i32
    %20 = vector.broadcast %c100_i32 : i32 to vector<128x128xi32>
    %21 = arith.cmpi slt, %19, %20 : vector<128x128xi32>
    %22 = math.exp %18 : vector<128x128xf32>
    %cst_6 = arith.constant 0.000000e+00 : f32
    %23 = vector.broadcast %cst_6 : f32 to vector<128x128xf32>
    %24 = arith.select %21, %22, %23 : vector<128x128xi1>, vector<128x128xf32>
    %cst_7 = arith.constant dense<0.000000e+00> : vector<128xf32>
    %25 = vector.multi_reduction <add>, %24, %cst_7 [1] : vector<128x128xf32> to vector<128xf32>
    %26 = vector.shape_cast %25 : vector<128xf32> to vector<128x1xf32>
    %27 = math.exp %15 : vector<128x128xf32>
    %28 = vector.broadcast %26 : vector<128x1xf32> to vector<128x128xf32>
    %29 = arith.addf %27, %28 : vector<128x128xf32>
    %30 = math.log %29 : vector<128x128xf32>
    %31 = arith.subf %15, %30 : vector<128x128xf32>
    %32 = tpu.iota {dimensions = array<i32: 0>} : vector<128x128xi32>
    %33 = arith.cmpi ne, %19, %32 : vector<128x128xi32>
    %34 = arith.andi %21, %33 : vector<128x128xi1>
    %cst_8 = arith.constant 0.000000e+00 : f32
    %35 = vector.broadcast %cst_8 : f32 to vector<128x128xf32>
    %36 = arith.select %34, %31, %35 : vector<128x128xi1>, vector<128x128xf32>
    %cst_9 = arith.constant dense<0.000000e+00> : vector<128xf32>
    %37 = vector.multi_reduction <add>, %36, %cst_9 [1] : vector<128x128xf32> to vector<128xf32>
    %38 = vector.shape_cast %37 : vector<128xf32> to vector<128x1xf32>
    %39 = vector.extract_strided_slice %10 {offsets = [128, 0], sizes = [128, 128], strides = [1, 1]} : vector<256x128xf32> to vector<128x128xf32>
    %cst_10 = arith.constant dense<0.000000e+00> : vector<128x256xf32>
    %40 = tpu.matmul %39, %10, %cst_10 {dimension_numbers = #tpu.dot_dimension_numbers<[1], [1], [0], [0], [0, 0, 1, 0], [], []>} : vector<128x128xf32>, vector<256x128xf32>, vector<128x256xf32> -> vector<128x256xf32>
    %41 = vector.extract_strided_slice %40 {offsets = [0, 128], sizes = [128, 128], strides = [1, 1]} : vector<128x256xf32> to vector<128x128xf32>
    %cst_11 = arith.constant 1.000000e+01 : f32
    %42 = vector.broadcast %cst_11 : f32 to vector<128x128xf32>
    %43 = arith.subf %41, %42 : vector<128x128xf32>
    %44 = vector.extract_strided_slice %40 {offsets = [0, 0], sizes = [128, 128], strides = [1, 1]} : vector<128x256xf32> to vector<128x128xf32>
    %cst_12 = arith.constant 1.000000e+01 : f32
    %45 = vector.broadcast %cst_12 : f32 to vector<128x128xf32>
    %46 = arith.subf %44, %45 : vector<128x128xf32>
    %47 = tpu.iota {dimensions = array<i32: 1>} : vector<128x128xi32>
    %c100_i32_13 = arith.constant 100 : i32
    %48 = vector.broadcast %c100_i32_13 : i32 to vector<128x128xi32>
    %49 = arith.cmpi slt, %47, %48 : vector<128x128xi32>
    %50 = math.exp %46 : vector<128x128xf32>
    %cst_14 = arith.constant 0.000000e+00 : f32
    %51 = vector.broadcast %cst_14 : f32 to vector<128x128xf32>
    %52 = arith.select %49, %50, %51 : vector<128x128xi1>, vector<128x128xf32>
    %cst_15 = arith.constant dense<0.000000e+00> : vector<128xf32>
    %53 = vector.multi_reduction <add>, %52, %cst_15 [1] : vector<128x128xf32> to vector<128xf32>
    %54 = vector.shape_cast %53 : vector<128xf32> to vector<128x1xf32>
    %55 = math.exp %43 : vector<128x128xf32>
    %56 = vector.broadcast %54 : vector<128x1xf32> to vector<128x128xf32>
    %57 = arith.addf %55, %56 : vector<128x128xf32>
    %58 = math.log %57 : vector<128x128xf32>
    %59 = arith.subf %43, %58 : vector<128x128xf32>
    %cst_16 = arith.constant 0.000000e+00 : f32
    %60 = vector.broadcast %cst_16 : f32 to vector<128x128xf32>
    %61 = arith.select %49, %59, %60 : vector<128x128xi1>, vector<128x128xf32>
    %cst_17 = arith.constant dense<0.000000e+00> : vector<128xf32>
    %62 = vector.multi_reduction <add>, %61, %cst_17 [1] : vector<128x128xf32> to vector<128xf32>
    %63 = vector.shape_cast %62 : vector<128xf32> to vector<128x1xf32>
    %64 = tpu.iota {dimensions = array<i32: 0>} : vector<128x1xi32>
    %c100_i32_18 = arith.constant 100 : i32
    %65 = vector.broadcast %c100_i32_18 : i32 to vector<128x1xi32>
    %66 = arith.cmpi slt, %64, %65 : vector<128x1xi32>
    %cst_19 = arith.constant 0.000000e+00 : f32
    %67 = vector.broadcast %cst_19 : f32 to vector<128x1xf32>
    %68 = arith.select %66, %38, %67 : vector<128x1xi1>, vector<128x1xf32>
    %69 = vector.shape_cast %68 : vector<128x1xf32> to vector<1x128x1xf32>
    %cst_20 = arith.constant dense<0.000000e+00> : vector<1xf32>
    %70 = vector.multi_reduction <add>, %69, %cst_20 [1, 2] : vector<1x128x1xf32> to vector<1xf32>
    %71 = vector.shape_cast %70 : vector<1xf32> to vector<1x1x1xf32>
    %72 = vector.extract %71[0, 0, 0] : f32 from vector<1x1x1xf32>
    %cst_21 = arith.constant 0.0101010101 : f32
    %73 = arith.mulf %72, %cst_21 : f32
    %cst_22 = arith.constant 0.000000e+00 : f32
    %74 = vector.broadcast %cst_22 : f32 to vector<128x1xf32>
    %75 = arith.select %66, %63, %74 : vector<128x1xi1>, vector<128x1xf32>
    %76 = vector.shape_cast %75 : vector<128x1xf32> to vector<1x128x1xf32>
    %cst_23 = arith.constant dense<0.000000e+00> : vector<1xf32>
    %77 = vector.multi_reduction <add>, %76, %cst_23 [1, 2] : vector<1x128x1xf32> to vector<1xf32>
    %78 = vector.shape_cast %77 : vector<1xf32> to vector<1x1x1xf32>
    %79 = vector.extract %78[0, 0, 0] : f32 from vector<1x1x1xf32>
    %cst_24 = arith.constant 0.00999999977 : f32
    %80 = arith.mulf %79, %cst_24 : f32
    %81 = arith.addf %73, %80 : f32
    %cst_25 = arith.constant -2.500000e-04 : f32
    %82 = arith.mulf %81, %cst_25 : f32
    %c0_26 = arith.constant 0 : index
    %c0_27 = arith.constant 0 : index
    %83 = memref.load %arg1[%c0_26, %c0_27] : memref<1x1xf32, #tpu.memory_space<smem>>
    memref.store %82, %arg1[%c0_26, %c0_27] : memref<1x1xf32, #tpu.memory_space<smem>>
    return
  }
}

</mosaic_0001>

<llo_original>
// kernel: pixel_contrast_loss.1
$region0: #{pixel_contrast_loss.1}
  #allocation0 [shape = 'u32[]', space=smem, size = 0x4, offset = 0x4, fixed_abs, tag = 'smem constant byte address 0x4 - core index']
  #allocation1 [shape = 'u32[144,128]{1,0:T(1,128)}', space=vmem, size = 0x12000, scoped, tag = 'internal scratch']
  %s0 = inlined_call_operand.vmem [shape: f32[256,128], index: 0, kind: input, shape index: {}]
  %s1 = inlined_call_operand.hbm [shape: f32[1,1], index: 1, kind: output, shape index: {}]
  %s2 = sld [smem:[#allocation0]]
  $region14: #{pixel_contrast_loss.1} parent=0
    _
  %s4 = ssub.s32 1, %s2
  %s5 = scalar_select 0, %s4, %s2
  $region1: #{pixel_contrast_loss.1} parent=0
    #allocation2 [shape = 'u8[512]{0}', space=smem, size = 0x200, scoped, tag = 'output window, operand 0, single buffered']
    #allocation3 [shape = 's32[1]{0}', space=sflag, size = 0x4, scoped, tag = 'scoped memory for pixel_contrast_loss.1']
    %6 = vsyncpa [#allocation3], 0
    // Predicated region
    $region2: #{pixel_contrast_loss.1} parent=1 // pred_check
      _
    $region3: #{pixel_contrast_loss.1} parent=1 // pred_check_branch
      %8 = sbr.rel (0) target = $region5
    $region4: #{pixel_contrast_loss.1} parent=1 // pred_region
      _
    $region5: #{pixel_contrast_loss.1} parent=1 // pred_fallthru
      _
    %v9 = vld [vmem:[%s0] sm:$0xff]
    %v10 = vld [vmem:[%s0 + $0x8] sm:$0xff]
    %v11 = vld [vmem:[%s0 + $0x10] sm:$0xff]
    %v12 = vld [vmem:[%s0 + $0x18] sm:$0xff]
    %v13 = vld [vmem:[%s0 + $0x20] sm:$0xff]
    %v14 = vld [vmem:[%s0 + $0x28] sm:$0xff]
    %v15 = vld [vmem:[%s0 + $0x30] sm:$0xff]
    %v16 = vld [vmem:[%s0 + $0x38] sm:$0xff]
    %v17 = vld [vmem:[%s0 + $0x40] sm:$0xff]
    %v18 = vld [vmem:[%s0 + $0x48] sm:$0xff]
    %v19 = vld [vmem:[%s0 + $0x50] sm:$0xff]
    %v20 = vld [vmem:[%s0 + $0x58] sm:$0xff]
    %v21 = vld [vmem:[%s0 + $0x60] sm:$0xff]
    %v22 = vld [vmem:[%s0 + $0x68] sm:$0xff]
    %v23 = vld [vmem:[%s0 + $0x70] sm:$0xff]
    %v24 = vld [vmem:[%s0 + $0x78] sm:$0xff]
    %v25 = vld [vmem:[%s0 + $0x80] sm:$0xff]
    %v26 = vld [vmem:[%s0 + $0x88] sm:$0xff]
    %v27 = vld [vmem:[%s0 + $0x90] sm:$0xff]
    %v28 = vld [vmem:[%s0 + $0x98] sm:$0xff]
    %v29 = vld [vmem:[%s0 + $0xa0] sm:$0xff]
    %v30 = vld [vmem:[%s0 + $0xa8] sm:$0xff]
    %v31 = vld [vmem:[%s0 + $0xb0] sm:$0xff]
    %v32 = vld [vmem:[%s0 + $0xb8] sm:$0xff]
    %v33 = vld [vmem:[%s0 + $0xc0] sm:$0xff]
    %v34 = vld [vmem:[%s0 + $0xc8] sm:$0xff]
    %v35 = vld [vmem:[%s0 + $0xd0] sm:$0xff]
    %v36 = vld [vmem:[%s0 + $0xd8] sm:$0xff]
    %v37 = vld [vmem:[%s0 + $0xe0] sm:$0xff]
    %v38 = vld [vmem:[%s0 + $0xe8] sm:$0xff]
    %v39 = vld [vmem:[%s0 + $0xf0] sm:$0xff]
    %v40 = vld [vmem:[%s0 + $0xf8] sm:$0xff]
    %v41 = vmul.f32 %v9, %v9
    %v42 = vmul.f32 %v10, %v10
    %v43 = vmul.f32 %v11, %v11
    %v44 = vmul.f32 %v12, %v12
    %v45 = vmul.f32 %v13, %v13
    %v46 = vmul.f32 %v14, %v14
    %v47 = vmul.f32 %v15, %v15
    %v48 = vmul.f32 %v16, %v16
    %v49 = vmul.f32 %v17, %v17
    %v50 = vmul.f32 %v18, %v18
    %v51 = vmul.f32 %v19, %v19
    %v52 = vmul.f32 %v20, %v20
    %v53 = vmul.f32 %v21, %v21
    %v54 = vmul.f32 %v22, %v22
    %v55 = vmul.f32 %v23, %v23
    %v56 = vmul.f32 %v24, %v24
    %v57 = vmul.f32 %v25, %v25
    %v58 = vmul.f32 %v26, %v26
    %v59 = vmul.f32 %v27, %v27
    %v60 = vmul.f32 %v28, %v28
    %v61 = vmul.f32 %v29, %v29
    %v62 = vmul.f32 %v30, %v30
    %v63 = vmul.f32 %v31, %v31
    %v64 = vmul.f32 %v32, %v32
    %v65 = vmul.f32 %v33, %v33
    %v66 = vmul.f32 %v34, %v34
    %v67 = vmul.f32 %v35, %v35
    %v68 = vmul.f32 %v36, %v36
    %v69 = vmul.f32 %v37, %v37
    %v70 = vmul.f32 %v38, %v38
    %v71 = vmul.f32 %v39, %v39
    %v72 = vmul.f32 %v40, %v40
    %73 = vadd.xlane.f32.xlu0 %v41
    %v74 = vpop.xlane.xlu0 %73
    %75 = vadd.xlane.f32.xlu0 %v42
    %v76 = vpop.xlane.xlu0 %75
    %77 = vadd.xlane.f32.xlu0 %v43
    %v78 = vpop.xlane.xlu0 %77
    %79 = vadd.xlane.f32.xlu0 %v44
    %v80 = vpop.xlane.xlu0 %79
    %81 = vadd.xlane.f32.xlu0 %v45
    %v82 = vpop.xlane.xlu0 %81
    %83 = vadd.xlane.f32.xlu0 %v46
    %v84 = vpop.xlane.xlu0 %83
    %85 = vadd.xlane.f32.xlu0 %v47
    %v86 = vpop.xlane.xlu0 %85
    %87 = vadd.xlane.f32.xlu0 %v48
    %v88 = vpop.xlane.xlu0 %87
    %89 = vadd.xlane.f32.xlu0 %v49
    %v90 = vpop.xlane.xlu0 %89
    %91 = vadd.xlane.f32.xlu0 %v50
    %v92 = vpop.xlane.xlu0 %91
    %93 = vadd.xlane.f32.xlu0 %v51
    %v94 = vpop.xlane.xlu0 %93
    %95 = vadd.xlane.f32.xlu0 %v52
    %v96 = vpop.xlane.xlu0 %95
    %97 = vadd.xlane.f32.xlu0 %v53
    %v98 = vpop.xlane.xlu0 %97
    %99 = vadd.xlane.f32.xlu0 %v54
    %v100 = vpop.xlane.xlu0 %99
    %101 = vadd.xlane.f32.xlu0 %v55
    %v102 = vpop.xlane.xlu0 %101
    %103 = vadd.xlane.f32.xlu0 %v56
    %v104 = vpop.xlane.xlu0 %103
    %105 = vadd.xlane.f32.xlu0 %v57
    %v106 = vpop.xlane.xlu0 %105
    %107 = vadd.xlane.f32.xlu0 %v58
    %v108 = vpop.xlane.xlu0 %107
    %109 = vadd.xlane.f32.xlu0 %v59
    %v110 = vpop.xlane.xlu0 %109
    %111 = vadd.xlane.f32.xlu0 %v60
    %v112 = vpop.xlane.xlu0 %111
    %113 = vadd.xlane.f32.xlu0 %v61
    %v114 = vpop.xlane.xlu0 %113
    %115 = vadd.xlane.f32.xlu0 %v62
    %v116 = vpop.xlane.xlu0 %115
    %117 = vadd.xlane.f32.xlu0 %v63
    %v118 = vpop.xlane.xlu0 %117
    %119 = vadd.xlane.f32.xlu0 %v64
    %v120 = vpop.xlane.xlu0 %119
    %121 = vadd.xlane.f32.xlu0 %v65
    %v122 = vpop.xlane.xlu0 %121
    %123 = vadd.xlane.f32.xlu0 %v66
    %v124 = vpop.xlane.xlu0 %123
    %125 = vadd.xlane.f32.xlu0 %v67
    %v126 = vpop.xlane.xlu0 %125
    %127 = vadd.xlane.f32.xlu0 %v68
    %v128 = vpop.xlane.xlu0 %127
    %129 = vadd.xlane.f32.xlu0 %v69
    %v130 = vpop.xlane.xlu0 %129
    %131 = vadd.xlane.f32.xlu0 %v70
    %v132 = vpop.xlane.xlu0 %131
    %133 = vadd.xlane.f32.xlu0 %v71
    %v134 = vpop.xlane.xlu0 %133
    %135 = vadd.xlane.f32.xlu0 %v72
    %v136 = vpop.xlane.xlu0 %135
    %v137 = vmax.f32 %v74, 1e-24
    %v138 = vmax.f32 %v76, 1e-24
    %v139 = vmax.f32 %v78, 1e-24
    %v140 = vmax.f32 %v80, 1e-24
    %v141 = vmax.f32 %v82, 1e-24
    %v142 = vmax.f32 %v84, 1e-24
    %v143 = vmax.f32 %v86, 1e-24
    %v144 = vmax.f32 %v88, 1e-24
    %v145 = vmax.f32 %v90, 1e-24
    %v146 = vmax.f32 %v92, 1e-24
    %v147 = vmax.f32 %v94, 1e-24
    %v148 = vmax.f32 %v96, 1e-24
    %v149 = vmax.f32 %v98, 1e-24
    %v150 = vmax.f32 %v100, 1e-24
    %v151 = vmax.f32 %v102, 1e-24
    %v152 = vmax.f32 %v104, 1e-24
    %v153 = vmax.f32 %v106, 1e-24
    %v154 = vmax.f32 %v108, 1e-24
    %v155 = vmax.f32 %v110, 1e-24
    %v156 = vmax.f32 %v112, 1e-24
    %v157 = vmax.f32 %v114, 1e-24
    %v158 = vmax.f32 %v116, 1e-24
    %v159 = vmax.f32 %v118, 1e-24
    %v160 = vmax.f32 %v120, 1e-24
    %v161 = vmax.f32 %v122, 1e-24
    %v162 = vmax.f32 %v124, 1e-24
    %v163 = vmax.f32 %v126, 1e-24
    %v164 = vmax.f32 %v128, 1e-24
    %v165 = vmax.f32 %v130, 1e-24
    %v166 = vmax.f32 %v132, 1e-24
    %v167 = vmax.f32 %v134, 1e-24
    %v168 = vmax.f32 %v136, 1e-24
    %v169 = vrsqrt.pop %v137
    %v170 = vrsqrt.pop %v138
    %v171 = vrsqrt.pop %v139
    %v172 = vrsqrt.pop %v140
    %v173 = vrsqrt.pop %v141
    %v174 = vrsqrt.pop %v142
    %v175 = vrsqrt.pop %v143
    %v176 = vrsqrt.pop %v144
    %v177 = vrsqrt.pop %v145
    %v178 = vrsqrt.pop %v146
    %v179 = vrsqrt.pop %v147
    %v180 = vrsqrt.pop %v148
    %v181 = vrsqrt.pop %v149
    %v182 = vrsqrt.pop %v150
    %v183 = vrsqrt.pop %v151
    %v184 = vrsqrt.pop %v152
    %v185 = vrsqrt.pop %v153
    %v186 = vrsqrt.pop %v154
    %v187 = vrsqrt.pop %v155
    %v188 = vrsqrt.pop %v156
    %v189 = vrsqrt.pop %v157
    %v190 = vrsqrt.pop %v158
    %v191 = vrsqrt.pop %v159
    %v192 = vrsqrt.pop %v160
    %v193 = vrsqrt.pop %v161
    %v194 = vrsqrt.pop %v162
    %v195 = vrsqrt.pop %v163
    %v196 = vrsqrt.pop %v164
    %v197 = vrsqrt.pop %v165
    %v198 = vrsqrt.pop %v166
    %v199 = vrsqrt.pop %v167
    %v200 = vrsqrt.pop %v168
    %v201 = vmul.f32 %v169, 3.1622777
    %v202 = vmul.f32 %v170, 3.1622777
    %v203 = vmul.f32 %v171, 3.1622777
    %v204 = vmul.f32 %v172, 3.1622777
    %v205 = vmul.f32 %v173, 3.1622777
    %v206 = vmul.f32 %v174, 3.1622777
    %v207 = vmul.f32 %v175, 3.1622777
    %v208 = vmul.f32 %v176, 3.1622777
    %v209 = vmul.f32 %v177, 3.1622777
    %v210 = vmul.f32 %v178, 3.1622777
    %v211 = vmul.f32 %v179, 3.1622777
    %v212 = vmul.f32 %v180, 3.1622777
    %v213 = vmul.f32 %v181, 3.1622777
    %v214 = vmul.f32 %v182, 3.1622777
    %v215 = vmul.f32 %v183, 3.1622777
    %v216 = vmul.f32 %v184, 3.1622777
    %v217 = vmul.f32 %v185, 3.1622777
    %v218 = vmul.f32 %v186, 3.1622777
    %v219 = vmul.f32 %v187, 3.1622777
    %v220 = vmul.f32 %v188, 3.1622777
    %v221 = vmul.f32 %v189, 3.1622777
    %v222 = vmul.f32 %v190, 3.1622777
    %v223 = vmul.f32 %v191, 3.1622777
    %v224 = vmul.f32 %v192, 3.1622777
    %v225 = vmul.f32 %v193, 3.1622777
    %v226 = vmul.f32 %v194, 3.1622777
    %v227 = vmul.f32 %v195, 3.1622777
    %v228 = vmul.f32 %v196, 3.1622777
    %v229 = vmul.f32 %v197, 3.1622777
    %v230 = vmul.f32 %v198, 3.1622777
    %v231 = vmul.f32 %v199, 3.1622777
    %v232 = vmul.f32 %v200, 3.1622777
    %v233 = vmul.f32 %v9, %v201
    %v234 = vmul.f32 %v10, %v202
    %v235 = vmul.f32 %v11, %v203
    %v236 = vmul.f32 %v12, %v204
    %v237 = vmul.f32 %v13, %v205
    %v238 = vmul.f32 %v14, %v206
    %v239 = vmul.f32 %v15, %v207
    %v240 = vmul.f32 %v16, %v208
    %v241 = vmul.f32 %v17, %v209
    %v242 = vmul.f32 %v18, %v210
    %v243 = vmul.f32 %v19, %v211
    %v244 = vmul.f32 %v20, %v212
    %v245 = vmul.f32 %v21, %v213
    %v246 = vmul.f32 %v22, %v214
    %v247 = vmul.f32 %v23, %v215
    %v248 = vmul.f32 %v24, %v216
    %v249 = vmul.f32 %v25, %v217
    %v250 = vmul.f32 %v26, %v218
    %v251 = vmul.f32 %v27, %v219
    %v252 = vmul.f32 %v28, %v220
    %v253 = vmul.f32 %v29, %v221
    %v254 = vmul.f32 %v30, %v222
    %v255 = vmul.f32 %v31, %v223
    %v256 = vmul.f32 %v32, %v224
    %v257 = vmul.f32 %v33, %v225
    %v258 = vmul.f32 %v34, %v226
    %v259 = vmul.f32 %v35, %v227
    %v260 = vmul.f32 %v36, %v228
    %v261 = vmul.f32 %v37, %v229
    %v262 = vmul.f32 %v38, %v230
    %v263 = vmul.f32 %v39, %v231
    %v264 = vmul.f32 %v40, %v232
    %265 = vmatprep.subr.mxu0 0.0
    %266 = vmatpush1.xpose.msra.mxu0 %v248
    %267 = vmatprep.subr.mxu0 0.0
    %268 = vmatpush1.xpose.msra.mxu0 %v247
    %269 = vmatprep.subr.mxu0 0.0
    %270 = vmatpush1.xpose.msra.mxu0 %v246
    %271 = vmatprep.subr.mxu0 0.0
    %272 = vmatpush1.xpose.msra.mxu0 %v245
    %273 = vmatprep.subr.mxu0 0.0
    %274 = vmatpush1.xpose.msra.mxu0 %v244
    %275 = vmatprep.subr.mxu0 0.0
    %276 = vmatpush1.xpose.msra.mxu0 %v243
    %277 = vmatprep.subr.mxu0 0.0
    %278 = vmatpush1.xpose.msra.mxu0 %v242
    %279 = vmatprep.subr.mxu0 0.0
    %280 = vmatpush1.xpose.msra.mxu0 %v241
    %281 = vmatprep.subr.mxu0 0.0
    %282 = vmatpush1.xpose.msra.mxu0 %v240
    %283 = vmatprep.subr.mxu0 0.0
    %284 = vmatpush1.xpose.msra.mxu0 %v239
    %285 = vmatprep.subr.mxu0 0.0
    %286 = vmatpush1.xpose.msra.mxu0 %v238
    %287 = vmatprep.subr.mxu0 0.0
    %288 = vmatpush1.xpose.msra.mxu0 %v237
    %289 = vmatprep.subr.mxu0 0.0
    %290 = vmatpush1.xpose.msra.mxu0 %v236
    %291 = vmatprep.subr.mxu0 0.0
    %292 = vmatpush1.xpose.msra.mxu0 %v235
    %293 = vmatprep.subr.mxu0 0.0
    %294 = vmatpush1.xpose.msra.mxu0 %v234
    %295 = vmatprep.subr.mxu0 0.0
    %296 = vmatpush1.xpose.msra.mxu0 %v233
    %297 = vmatprep.subr.mxu0 0.0
    %298 = vmatpush2.xpose.msra.mxu0 %v264
    %299 = vmatprep.subr.mxu0 0.0
    %300 = vmatpush2.xpose.msra.mxu0 %v263
    %301 = vmatprep.subr.mxu0 0.0
    %302 = vmatpush2.xpose.msra.mxu0 %v262
    %303 = vmatprep.subr.mxu0 0.0
    %304 = vmatpush2.xpose.msra.mxu0 %v261
    %305 = vmatprep.subr.mxu0 0.0
    %306 = vmatpush2.xpose.msra.mxu0 %v260
    %307 = vmatprep.subr.mxu0 0.0
    %308 = vmatpush2.xpose.msra.mxu0 %v259
    %309 = vmatprep.subr.mxu0 0.0
    %310 = vmatpush2.xpose.msra.mxu0 %v258
    %311 = vmatprep.subr.mxu0 0.0
    %312 = vmatpush2.xpose.msra.mxu0 %v257
    %313 = vmatprep.subr.mxu0 0.0
    %314 = vmatpush2.xpose.msra.mxu0 %v256
    %315 = vmatprep.subr.mxu0 0.0
    %316 = vmatpush2.xpose.msra.mxu0 %v255
    %317 = vmatprep.subr.mxu0 0.0
    %318 = vmatpush2.xpose.msra.mxu0 %v254
    %319 = vmatprep.subr.mxu0 0.0
    %320 = vmatpush2.xpose.msra.mxu0 %v253
    %321 = vmatprep.subr.mxu0 0.0
    %322 = vmatpush2.xpose.msra.mxu0 %v252
    %323 = vmatprep.subr.mxu0 0.0
    %324 = vmatpush2.xpose.msra.mxu0 %v251
    %325 = vmatprep.subr.mxu0 0.0
    %326 = vmatpush2.xpose.msra.mxu0 %v250
    %327 = vmatprep.subr.mxu0 0.0
    %328 = vmatpush2.xpose.msra.mxu0 %v249
    %329 = vmatprep.mubr.f32.mxu0 0.0
    %330 = vmatmul.mubr.f32.gmra.mxu0 %v233
    %v331 = vpop.f32.mrf.mxu0
    %v332 = vadd.f32 0.0, %v331
    %v333 = vpop.f32.mrf.mxu0
    %v334 = vadd.f32 0.0, %v333
    %335 = vmatprep.mubr.f32.mxu0 0.0
    %336 = vmatmul.mubr.f32.gmra.mxu0 %v234
    %v337 = vpop.f32.mrf.mxu0
    %v338 = vadd.f32 0.0, %v337
    %v339 = vpop.f32.mrf.mxu0
    %v340 = vadd.f32 0.0, %v339
    %341 = vmatprep.mubr.f32.mxu0 0.0
    %342 = vmatmul.mubr.f32.gmra.mxu0 %v235
    %v343 = vpop.f32.mrf.mxu0
    %v344 = vadd.f32 0.0, %v343
    %v345 = vpop.f32.mrf.mxu0
    %v346 = vadd.f32 0.0, %v345
    %347 = vmatprep.mubr.f32.mxu0 0.0
    %348 = vmatmul.mubr.f32.gmra.mxu0 %v236
    %v349 = vpop.f32.mrf.mxu0
    %v350 = vadd.f32 0.0, %v349
    %v351 = vpop.f32.mrf.mxu0
    %v352 = vadd.f32 0.0, %v351
    %353 = vmatprep.mubr.f32.mxu0 0.0
    %354 = vmatmul.mubr.f32.gmra.mxu0 %v237
    %v355 = vpop.f32.mrf.mxu0
    %v356 = vadd.f32 0.0, %v355
    %v357 = vpop.f32.mrf.mxu0
    %v358 = vadd.f32 0.0, %v357
    %359 = vmatprep.mubr.f32.mxu0 0.0
    %360 = vmatmul.mubr.f32.gmra.mxu0 %v238
    %v361 = vpop.f32.mrf.mxu0
    %v362 = vadd.f32 0.0, %v361
    %v363 = vpop.f32.mrf.mxu0
    %v364 = vadd.f32 0.0, %v363
    %365 = vmatprep.mubr.f32.mxu0 0.0
    %366 = vmatmul.mubr.f32.gmra.mxu0 %v239
    %v367 = vpop.f32.mrf.mxu0
    %v368 = vadd.f32 0.0, %v367
    %v369 = vpop.f32.mrf.mxu0
    %v370 = vadd.f32 0.0, %v369
    %371 = vmatprep.mubr.f32.mxu0 0.0
    %372 = vmatmul.mubr.f32.gmra.mxu0 %v240
    %v373 = vpop.f32.mrf.mxu0
    %v374 = vadd.f32 0.0, %v373
    %v375 = vpop.f32.mrf.mxu0
    %v376 = vadd.f32 0.0, %v375
    %377 = vmatprep.mubr.f32.mxu0 0.0
    %378 = vmatmul.mubr.f32.gmra.mxu0 %v241
    %v379 = vpop.f32.mrf.mxu0
    %v380 = vadd.f32 0.0, %v379
    %v381 = vpop.f32.mrf.mxu0
    %v382 = vadd.f32 0.0, %v381
    %383 = vmatprep.mubr.f32.mxu0 0.0
    %384 = vmatmul.mubr.f32.gmra.mxu0 %v242
    %v385 = vpop.f32.mrf.mxu0
    %v386 = vadd.f32 0.0, %v385
    %v387 = vpop.f32.mrf.mxu0
    %v388 = vadd.f32 0.0, %v387
    %389 = vmatprep.mubr.f32.mxu0 0.0
    %390 = vmatmul.mubr.f32.gmra.mxu0 %v243
    %v391 = vpop.f32.mrf.mxu0
    %v392 = vadd.f32 0.0, %v391
    %v393 = vpop.f32.mrf.mxu0
    %v394 = vadd.f32 0.0, %v393
    %395 = vmatprep.mubr.f32.mxu0 0.0
    %396 = vmatmul.mubr.f32.gmra.mxu0 %v244
    %v397 = vpop.f32.mrf.mxu0
    %v398 = vadd.f32 0.0, %v397
    %v399 = vpop.f32.mrf.mxu0
    %v400 = vadd.f32 0.0, %v399
    %401 = vmatprep.mubr.f32.mxu0 0.0
    %402 = vmatmul.mubr.f32.gmra.mxu0 %v245
    %v403 = vpop.f32.mrf.mxu0
    %v404 = vadd.f32 0.0, %v403
    %v405 = vpop.f32.mrf.mxu0
    %v406 = vadd.f32 0.0, %v405
    %407 = vmatprep.mubr.f32.mxu0 0.0
    %408 = vmatmul.mubr.f32.gmra.mxu0 %v246
    %v409 = vpop.f32.mrf.mxu0
    %v410 = vadd.f32 0.0, %v409
    %v411 = vpop.f32.mrf.mxu0
    %v412 = vadd.f32 0.0, %v411
    %413 = vmatprep.mubr.f32.mxu0 0.0
    %414 = vmatmul.mubr.f32.gmra.mxu0 %v247
    %v415 = vpop.f32.mrf.mxu0
    %v416 = vadd.f32 0.0, %v415
    %v417 = vpop.f32.mrf.mxu0
    %v418 = vadd.f32 0.0, %v417
    %419 = vmatprep.mubr.f32.mxu0 0.0
    %420 = vmatmul.mubr.f32.gmra.mxu0 %v248
    %v421 = vpop.f32.mrf.mxu0
    %v422 = vadd.f32 0.0, %v421
    %v423 = vpop.f32.mrf.mxu0
    %v424 = vadd.f32 0.0, %v423
    %425 = vdwg.mxu0
    %v426 = vsub.f32 %v332, 10.0
    %v427 = vsub.f32 %v338, 10.0
    %v428 = vsub.f32 %v344, 10.0
    %v429 = vsub.f32 %v350, 10.0
    %v430 = vsub.f32 %v356, 10.0
    %v431 = vsub.f32 %v362, 10.0
    %v432 = vsub.f32 %v368, 10.0
    %v433 = vsub.f32 %v374, 10.0
    %v434 = vsub.f32 %v380, 10.0
    %v435 = vsub.f32 %v386, 10.0
    %v436 = vsub.f32 %v392, 10.0
    %v437 = vsub.f32 %v398, 10.0
    %v438 = vsub.f32 %v404, 10.0
    %v439 = vsub.f32 %v410, 10.0
    %v440 = vsub.f32 %v416, 10.0
    %v441 = vsub.f32 %v422, 10.0
    %v442 = vsub.f32 %v334, 10.0
    %v443 = vsub.f32 %v340, 10.0
    %v444 = vsub.f32 %v346, 10.0
    %v445 = vsub.f32 %v352, 10.0
    %v446 = vsub.f32 %v358, 10.0
    %v447 = vsub.f32 %v364, 10.0
    %v448 = vsub.f32 %v370, 10.0
    %v449 = vsub.f32 %v376, 10.0
    %v450 = vsub.f32 %v382, 10.0
    %v451 = vsub.f32 %v388, 10.0
    %v452 = vsub.f32 %v394, 10.0
    %v453 = vsub.f32 %v400, 10.0
    %v454 = vsub.f32 %v406, 10.0
    %v455 = vsub.f32 %v412, 10.0
    %v456 = vsub.f32 %v418, 10.0
    %v457 = vsub.f32 %v424, 10.0
    %v458 = vlaneseq
    %v459 = vand.u32 %v458, 127
    %vm460 = vcmp.lt.s32.totalorder %v459, 100
    %v461 = vmul.f32 %v442, 1.442695
    %v462 = vpow.pop %v461
    %v463 = vmul.f32 %v443, 1.442695
    %v464 = vpow.pop %v463
    %v465 = vmul.f32 %v444, 1.442695
    %v466 = vpow.pop %v465
    %v467 = vmul.f32 %v445, 1.442695
    %v468 = vpow.pop %v467
    %v469 = vmul.f32 %v446, 1.442695
    %v470 = vpow.pop %v469
    %v471 = vmul.f32 %v447, 1.442695
    %v472 = vpow.pop %v471
    %v473 = vmul.f32 %v448, 1.442695
    %v474 = vpow.pop %v473
    %v475 = vmul.f32 %v449, 1.442695
    %v476 = vpow.pop %v475
    %v477 = vmul.f32 %v450, 1.442695
    %v478 = vpow.pop %v477
    %v479 = vmul.f32 %v451, 1.442695
    %v480 = vpow.pop %v479
    %v481 = vmul.f32 %v452, 1.442695
    %v482 = vpow.pop %v481
    %v483 = vmul.f32 %v453, 1.442695
    %v484 = vpow.pop %v483
    %v485 = vmul.f32 %v454, 1.442695
    %v486 = vpow.pop %v485
    %v487 = vmul.f32 %v455, 1.442695
    %v488 = vpow.pop %v487
    %v489 = vmul.f32 %v456, 1.442695
    %v490 = vpow.pop %v489
    %v491 = vmul.f32 %v457, 1.442695
    %v492 = vpow.pop %v491
    %v493 = vsel %vm460, %v462, 0.0
    %v494 = vsel %vm460, %v464, 0.0
    %v495 = vsel %vm460, %v466, 0.0
    %v496 = vsel %vm460, %v468, 0.0
    %v497 = vsel %vm460, %v470, 0.0
    %v498 = vsel %vm460, %v472, 0.0
    %v499 = vsel %vm460, %v474, 0.0
    %v500 = vsel %vm460, %v476, 0.0
    %v501 = vsel %vm460, %v478, 0.0
    %v502 = vsel %vm460, %v480, 0.0
    %v503 = vsel %vm460, %v482, 0.0
    %v504 = vsel %vm460, %v484, 0.0
    %v505 = vsel %vm460, %v486, 0.0
    %v506 = vsel %vm460, %v488, 0.0
    %v507 = vsel %vm460, %v490, 0.0
    %v508 = vsel %vm460, %v492, 0.0
    %509 = vadd.xlane.f32.xlu0 %v493
    %v510 = vpop.xlane.xlu0 %509
    %511 = vadd.xlane.f32.xlu0 %v494
    %v512 = vpop.xlane.xlu0 %511
    %513 = vadd.xlane.f32.xlu0 %v495
    %v514 = vpop.xlane.xlu0 %513
    %515 = vadd.xlane.f32.xlu0 %v496
    %v516 = vpop.xlane.xlu0 %515
    %517 = vadd.xlane.f32.xlu0 %v497
    %v518 = vpop.xlane.xlu0 %517
    %519 = vadd.xlane.f32.xlu0 %v498
    %v520 = vpop.xlane.xlu0 %519
    %521 = vadd.xlane.f32.xlu0 %v499
    %v522 = vpop.xlane.xlu0 %521
    %523 = vadd.xlane.f32.xlu0 %v500
    %v524 = vpop.xlane.xlu0 %523
    %525 = vadd.xlane.f32.xlu0 %v501
    %v526 = vpop.xlane.xlu0 %525
    %527 = vadd.xlane.f32.xlu0 %v502
    %v528 = vpop.xlane.xlu0 %527
    %529 = vadd.xlane.f32.xlu0 %v503
    %v530 = vpop.xlane.xlu0 %529
    %531 = vadd.xlane.f32.xlu0 %v504
    %v532 = vpop.xlane.xlu0 %531
    %533 = vadd.xlane.f32.xlu0 %v505
    %v534 = vpop.xlane.xlu0 %533
    %535 = vadd.xlane.f32.xlu0 %v506
    %v536 = vpop.xlane.xlu0 %535
    %537 = vadd.xlane.f32.xlu0 %v507
    %v538 = vpop.xlane.xlu0 %537
    %539 = vadd.xlane.f32.xlu0 %v508
    %v540 = vpop.xlane.xlu0 %539
    %v541 = vmul.f32 %v426, 1.442695
    %v542 = vpow.pop %v541
    %v543 = vmul.f32 %v427, 1.442695
    %v544 = vpow.pop %v543
    %v545 = vmul.f32 %v428, 1.442695
    %v546 = vpow.pop %v545
    %v547 = vmul.f32 %v429, 1.442695
    %v548 = vpow.pop %v547
    %v549 = vmul.f32 %v430, 1.442695
    %v550 = vpow.pop %v549
    %v551 = vmul.f32 %v431, 1.442695
    %v552 = vpow.pop %v551
    %v553 = vmul.f32 %v432, 1.442695
    %v554 = vpow.pop %v553
    %v555 = vmul.f32 %v433, 1.442695
    %v556 = vpow.pop %v555
    %v557 = vmul.f32 %v434, 1.442695
    %v558 = vpow.pop %v557
    %v559 = vmul.f32 %v435, 1.442695
    %v560 = vpow.pop %v559
    %v561 = vmul.f32 %v436, 1.442695
    %v562 = vpow.pop %v561
    %v563 = vmul.f32 %v437, 1.442695
    %v564 = vpow.pop %v563
    %v565 = vmul.f32 %v438, 1.442695
    %v566 = vpow.pop %v565
    %v567 = vmul.f32 %v439, 1.442695
    %v568 = vpow.pop %v567
    %v569 = vmul.f32 %v440, 1.442695
    %v570 = vpow.pop %v569
    %v571 = vmul.f32 %v441, 1.442695
    %v572 = vpow.pop %v571
    %v573 = vadd.f32 %v542, %v510
    %v574 = vadd.f32 %v544, %v512
    %v575 = vadd.f32 %v546, %v514
    %v576 = vadd.f32 %v548, %v516
    %v577 = vadd.f32 %v550, %v518
    %v578 = vadd.f32 %v552, %v520
    %v579 = vadd.f32 %v554, %v522
    %v580 = vadd.f32 %v556, %v524
    %v581 = vadd.f32 %v558, %v526
    %v582 = vadd.f32 %v560, %v528
    %v583 = vadd.f32 %v562, %v530
    %v584 = vadd.f32 %v564, %v532
    %v585 = vadd.f32 %v566, %v534
    %v586 = vadd.f32 %v568, %v536
    %v587 = vadd.f32 %v570, %v538
    %v588 = vadd.f32 %v572, %v540
    %v589 = vlog2.pop %v573
    %v590 = vmul.f32 %v589, 0.6931472
    %v591 = vlog2.pop %v574
    %v592 = vmul.f32 %v591, 0.6931472
    %v593 = vlog2.pop %v575
    %v594 = vmul.f32 %v593, 0.6931472
    %v595 = vlog2.pop %v576
    %v596 = vmul.f32 %v595, 0.6931472
    %v597 = vlog2.pop %v577
    %v598 = vmul.f32 %v597, 0.6931472
    %v599 = vlog2.pop %v578
    %v600 = vmul.f32 %v599, 0.6931472
    %v601 = vlog2.pop %v579
    %v602 = vmul.f32 %v601, 0.6931472
    %v603 = vlog2.pop %v580
    %v604 = vmul.f32 %v603, 0.6931472
    %v605 = vlog2.pop %v581
    %v606 = vmul.f32 %v605, 0.6931472
    %v607 = vlog2.pop %v582
    %v608 = vmul.f32 %v607, 0.6931472
    %v609 = vlog2.pop %v583
    %v610 = vmul.f32 %v609, 0.6931472
    %v611 = vlog2.pop %v584
    %v612 = vmul.f32 %v611, 0.6931472
    %v613 = vlog2.pop %v585
    %v614 = vmul.f32 %v613, 0.6931472
    %v615 = vlog2.pop %v586
    %v616 = vmul.f32 %v615, 0.6931472
    %v617 = vlog2.pop %v587
    %v618 = vmul.f32 %v617, 0.6931472
    %v619 = vlog2.pop %v588
    %v620 = vmul.f32 %v619, 0.6931472
    %v621 = vsub.f32 %v426, %v590
    %v622 = vsub.f32 %v427, %v592
    %v623 = vsub.f32 %v428, %v594
    %v624 = vsub.f32 %v429, %v596
    %v625 = vsub.f32 %v430, %v598
    %v626 = vsub.f32 %v431, %v600
    %v627 = vsub.f32 %v432, %v602
    %v628 = vsub.f32 %v433, %v604
    %v629 = vsub.f32 %v434, %v606
    %v630 = vsub.f32 %v435, %v608
    %v631 = vsub.f32 %v436, %v610
    %v632 = vsub.f32 %v437, %v612
    %v633 = vsub.f32 %v438, %v614
    %v634 = vsub.f32 %v439, %v616
    %v635 = vsub.f32 %v440, %v618
    %v636 = vsub.f32 %v441, %v620
    %v637 = vlaneseq
    %v638 = vshrl.u32 %v637, 7
    %v639 = vadd.s32 %v638, 8
    %v640 = vadd.s32 %v638, 16
    %v641 = vadd.s32 %v638, 24
    %v642 = vadd.s32 %v638, 32
    %v643 = vadd.s32 %v638, 40
    %v644 = vadd.s32 %v638, 48
    %v645 = vadd.s32 %v638, 56
    %v646 = vadd.s32 %v638, 64
    %v647 = vadd.s32 %v638, 72
    %v648 = vadd.s32 %v638, 80
    %v649 = vadd.s32 %v638, 88
    %v650 = vadd.s32 %v638, 96
    %v651 = vadd.s32 %v638, 104
    %v652 = vadd.s32 %v638, 112
    %v653 = vadd.s32 %v638, 120
    %vm654 = vcmp.ne.s32.totalorder %v459, %v638
    %vm655 = vcmp.ne.s32.totalorder %v459, %v639
    %vm656 = vcmp.ne.s32.totalorder %v459, %v640
    %vm657 = vcmp.ne.s32.totalorder %v459, %v641
    %vm658 = vcmp.ne.s32.totalorder %v459, %v642
    %vm659 = vcmp.ne.s32.totalorder %v459, %v643
    %vm660 = vcmp.ne.s32.totalorder %v459, %v644
    %vm661 = vcmp.ne.s32.totalorder %v459, %v645
    %vm662 = vcmp.ne.s32.totalorder %v459, %v646
    %vm663 = vcmp.ne.s32.totalorder %v459, %v647
    %vm664 = vcmp.ne.s32.totalorder %v459, %v648
    %vm665 = vcmp.ne.s32.totalorder %v459, %v649
    %vm666 = vcmp.ne.s32.totalorder %v459, %v650
    %vm667 = vcmp.ne.s32.totalorder %v459, %v651
    %vm668 = vcmp.ne.s32.totalorder %v459, %v652
    %vm669 = vcmp.ne.s32.totalorder %v459, %v653
    %vm670 = vmand %vm460, %vm654
    %vm671 = vmand %vm460, %vm655
    %vm672 = vmand %vm460, %vm656
    %vm673 = vmand %vm460, %vm657
    %vm674 = vmand %vm460, %vm658
    %vm675 = vmand %vm460, %vm659
    %vm676 = vmand %vm460, %vm660
    %vm677 = vmand %vm460, %vm661
    %vm678 = vmand %vm460, %vm662
    %vm679 = vmand %vm460, %vm663
    %vm680 = vmand %vm460, %vm664
    %vm681 = vmand %vm460, %vm665
    %vm682 = vmand %vm460, %vm666
    %vm683 = vmand %vm460, %vm667
    %vm684 = vmand %vm460, %vm668
    %vm685 = vmand %vm460, %vm669
    %v686 = vsel %vm670, %v621, 0.0
    %v687 = vsel %vm671, %v622, 0.0
    %v688 = vsel %vm672, %v623, 0.0
    %v689 = vsel %vm673, %v624, 0.0
    %v690 = vsel %vm674, %v625, 0.0
    %v691 = vsel %vm675, %v626, 0.0
    %v692 = vsel %vm676, %v627, 0.0
    %v693 = vsel %vm677, %v628, 0.0
    %v694 = vsel %vm678, %v629, 0.0
    %v695 = vsel %vm679, %v630, 0.0
    %v696 = vsel %vm680, %v631, 0.0
    %v697 = vsel %vm681, %v632, 0.0
    %v698 = vsel %vm682, %v633, 0.0
    %v699 = vsel %vm683, %v634, 0.0
    %v700 = vsel %vm684, %v635, 0.0
    %v701 = vsel %vm685, %v636, 0.0
    %702 = vadd.xlane.f32.xlu0 %v686
    %v703 = vpop.xlane.xlu0 %702
    %704 = vadd.xlane.f32.xlu0 %v687
    %v705 = vpop.xlane.xlu0 %704
    %706 = vadd.xlane.f32.xlu0 %v688
    %v707 = vpop.xlane.xlu0 %706
    %708 = vadd.xlane.f32.xlu0 %v689
    %v709 = vpop.xlane.xlu0 %708
    %710 = vadd.xlane.f32.xlu0 %v690
    %v711 = vpop.xlane.xlu0 %710
    %712 = vadd.xlane.f32.xlu0 %v691
    %v713 = vpop.xlane.xlu0 %712
    %714 = vadd.xlane.f32.xlu0 %v692
    %v715 = vpop.xlane.xlu0 %714
    %716 = vadd.xlane.f32.xlu0 %v693
    %v717 = vpop.xlane.xlu0 %716
    %718 = vadd.xlane.f32.xlu0 %v694
    %v719 = vpop.xlane.xlu0 %718
    %720 = vadd.xlane.f32.xlu0 %v695
    %v721 = vpop.xlane.xlu0 %720
    %722 = vadd.xlane.f32.xlu0 %v696
    %v723 = vpop.xlane.xlu0 %722
    %724 = vadd.xlane.f32.xlu0 %v697
    %v725 = vpop.xlane.xlu0 %724
    %726 = vadd.xlane.f32.xlu0 %v698
    %v727 = vpop.xlane.xlu0 %726
    %728 = vadd.xlane.f32.xlu0 %v699
    %v729 = vpop.xlane.xlu0 %728
    %730 = vadd.xlane.f32.xlu0 %v700
    %v731 = vpop.xlane.xlu0 %730
    %732 = vadd.xlane.f32.xlu0 %v701
    %v733 = vpop.xlane.xlu0 %732
    %734 = vmatprep.subr.mxu0 0.0
    %735 = vmatpush1.xpose.msra.mxu0 %v248
    %736 = vmatprep.subr.mxu0 0.0
    %737 = vmatpush1.xpose.msra.mxu0 %v247
    %738 = vmatprep.subr.mxu0 0.0
    %739 = vmatpush1.xpose.msra.mxu0 %v246
    %740 = vmatprep.subr.mxu0 0.0
    %741 = vmatpush1.xpose.msra.mxu0 %v245
    %742 = vmatprep.subr.mxu0 0.0
    %743 = vmatpush1.xpose.msra.mxu0 %v244
    %744 = vmatprep.subr.mxu0 0.0
    %745 = vmatpush1.xpose.msra.mxu0 %v243
    %746 = vmatprep.subr.mxu0 0.0
    %747 = vmatpush1.xpose.msra.mxu0 %v242
    %748 = vmatprep.subr.mxu0 0.0
    %749 = vmatpush1.xpose.msra.mxu0 %v241
    %750 = vmatprep.subr.mxu0 0.0
    %751 = vmatpush1.xpose.msra.mxu0 %v240
    %752 = vmatprep.subr.mxu0 0.0
    %753 = vmatpush1.xpose.msra.mxu0 %v239
    %754 = vmatprep.subr.mxu0 0.0
    %755 = vmatpush1.xpose.msra.mxu0 %v238
    %756 = vmatprep.subr.mxu0 0.0
    %757 = vmatpush1.xpose.msra.mxu0 %v237
    %758 = vmatprep.subr.mxu0 0.0
    %759 = vmatpush1.xpose.msra.mxu0 %v236
    %760 = vmatprep.subr.mxu0 0.0
    %761 = vmatpush1.xpose.msra.mxu0 %v235
    %762 = vmatprep.subr.mxu0 0.0
    %763 = vmatpush1.xpose.msra.mxu0 %v234
    %764 = vmatprep.subr.mxu0 0.0
    %765 = vmatpush1.xpose.msra.mxu0 %v233
    %766 = vmatprep.subr.mxu0 0.0
    %767 = vmatpush2.xpose.msra.mxu0 %v264
    %768 = vmatprep.subr.mxu0 0.0
    %769 = vmatpush2.xpose.msra.mxu0 %v263
    %770 = vmatprep.subr.mxu0 0.0
    %771 = vmatpush2.xpose.msra.mxu0 %v262
    %772 = vmatprep.subr.mxu0 0.0
    %773 = vmatpush2.xpose.msra.mxu0 %v261
    %774 = vmatprep.subr.mxu0 0.0
    %775 = vmatpush2.xpose.msra.mxu0 %v260
    %776 = vmatprep.subr.mxu0 0.0
    %777 = vmatpush2.xpose.msra.mxu0 %v259
    %778 = vmatprep.subr.mxu0 0.0
    %779 = vmatpush2.xpose.msra.mxu0 %v258
    %780 = vmatprep.subr.mxu0 0.0
    %781 = vmatpush2.xpose.msra.mxu0 %v257
    %782 = vmatprep.subr.mxu0 0.0
    %783 = vmatpush2.xpose.msra.mxu0 %v256
    %784 = vmatprep.subr.mxu0 0.0
    %785 = vmatpush2.xpose.msra.mxu0 %v255
    %786 = vmatprep.subr.mxu0 0.0
    %787 = vmatpush2.xpose.msra.mxu0 %v254
    %788 = vmatprep.subr.mxu0 0.0
    %789 = vmatpush2.xpose.msra.mxu0 %v253
    %790 = vmatprep.subr.mxu0 0.0
    %791 = vmatpush2.xpose.msra.mxu0 %v252
    %792 = vmatprep.subr.mxu0 0.0
    %793 = vmatpush2.xpose.msra.mxu0 %v251
    %794 = vmatprep.subr.mxu0 0.0
    %795 = vmatpush2.xpose.msra.mxu0 %v250
    %796 = vmatprep.subr.mxu0 0.0
    %797 = vmatpush2.xpose.msra.mxu0 %v249
    %798 = vmatprep.mubr.f32.mxu0 0.0
    %799 = vmatmul.mubr.f32.gmra.mxu0 %v249
    %v800 = vpop.f32.mrf.mxu0
    %v801 = vadd.f32 0.0, %v800
    %v802 = vpop.f32.mrf.mxu0
    %v803 = vadd.f32 0.0, %v802
    %804 = vmatprep.mubr.f32.mxu0 0.0
    %805 = vmatmul.mubr.f32.gmra.mxu0 %v250
    %v806 = vpop.f32.mrf.mxu0
    %v807 = vadd.f32 0.0, %v806
    %v808 = vpop.f32.mrf.mxu0
    %v809 = vadd.f32 0.0, %v808
    %810 = vmatprep.mubr.f32.mxu0 0.0
    %811 = vmatmul.mubr.f32.gmra.mxu0 %v251
    %v812 = vpop.f32.mrf.mxu0
    %v813 = vadd.f32 0.0, %v812
    %v814 = vpop.f32.mrf.mxu0
    %v815 = vadd.f32 0.0, %v814
    %816 = vmatprep.mubr.f32.mxu0 0.0
    %817 = vmatmul.mubr.f32.gmra.mxu0 %v252
    %v818 = vpop.f32.mrf.mxu0
    %v819 = vadd.f32 0.0, %v818
    %v820 = vpop.f32.mrf.mxu0
    %v821 = vadd.f32 0.0, %v820
    %822 = vmatprep.mubr.f32.mxu0 0.0
    %823 = vmatmul.mubr.f32.gmra.mxu0 %v253
    %v824 = vpop.f32.mrf.mxu0
    %v825 = vadd.f32 0.0, %v824
    %v826 = vpop.f32.mrf.mxu0
    %v827 = vadd.f32 0.0, %v826
    %828 = vmatprep.mubr.f32.mxu0 0.0
    %829 = vmatmul.mubr.f32.gmra.mxu0 %v254
    %v830 = vpop.f32.mrf.mxu0
    %v831 = vadd.f32 0.0, %v830
    %v832 = vpop.f32.mrf.mxu0
    %v833 = vadd.f32 0.0, %v832
    %834 = vmatprep.mubr.f32.mxu0 0.0
    %835 = vmatmul.mubr.f32.gmra.mxu0 %v255
    %v836 = vpop.f32.mrf.mxu0
    %v837 = vadd.f32 0.0, %v836
    %v838 = vpop.f32.mrf.mxu0
    %v839 = vadd.f32 0.0, %v838
    %840 = vmatprep.mubr.f32.mxu0 0.0
    %841 = vmatmul.mubr.f32.gmra.mxu0 %v256
    %v842 = vpop.f32.mrf.mxu0
    %v843 = vadd.f32 0.0, %v842
    %v844 = vpop.f32.mrf.mxu0
    %v845 = vadd.f32 0.0, %v844
    %846 = vmatprep.mubr.f32.mxu0 0.0
    %847 = vmatmul.mubr.f32.gmra.mxu0 %v257
    %v848 = vpop.f32.mrf.mxu0
    %v849 = vadd.f32 0.0, %v848
    %v850 = vpop.f32.mrf.mxu0
    %v851 = vadd.f32 0.0, %v850
    %852 = vmatprep.mubr.f32.mxu0 0.0
    %853 = vmatmul.mubr.f32.gmra.mxu0 %v258
    %v854 = vpop.f32.mrf.mxu0
    %v855 = vadd.f32 0.0, %v854
    %v856 = vpop.f32.mrf.mxu0
    %v857 = vadd.f32 0.0, %v856
    %858 = vmatprep.mubr.f32.mxu0 0.0
    %859 = vmatmul.mubr.f32.gmra.mxu0 %v259
    %v860 = vpop.f32.mrf.mxu0
    %v861 = vadd.f32 0.0, %v860
    %v862 = vpop.f32.mrf.mxu0
    %v863 = vadd.f32 0.0, %v862
    %864 = vmatprep.mubr.f32.mxu0 0.0
    %865 = vmatmul.mubr.f32.gmra.mxu0 %v260
    %v866 = vpop.f32.mrf.mxu0
    %v867 = vadd.f32 0.0, %v866
    %v868 = vpop.f32.mrf.mxu0
    %v869 = vadd.f32 0.0, %v868
    %870 = vmatprep.mubr.f32.mxu0 0.0
    %871 = vmatmul.mubr.f32.gmra.mxu0 %v261
    %v872 = vpop.f32.mrf.mxu0
    %v873 = vadd.f32 0.0, %v872
    %v874 = vpop.f32.mrf.mxu0
    %v875 = vadd.f32 0.0, %v874
    %876 = vmatprep.mubr.f32.mxu0 0.0
    %877 = vmatmul.mubr.f32.gmra.mxu0 %v262
    %v878 = vpop.f32.mrf.mxu0
    %v879 = vadd.f32 0.0, %v878
    %v880 = vpop.f32.mrf.mxu0
    %v881 = vadd.f32 0.0, %v880
    %882 = vmatprep.mubr.f32.mxu0 0.0
    %883 = vmatmul.mubr.f32.gmra.mxu0 %v263
    %v884 = vpop.f32.mrf.mxu0
    %v885 = vadd.f32 0.0, %v884
    %v886 = vpop.f32.mrf.mxu0
    %v887 = vadd.f32 0.0, %v886
    %888 = vmatprep.mubr.f32.mxu0 0.0
    %889 = vmatmul.mubr.f32.gmra.mxu0 %v264
    %v890 = vpop.f32.mrf.mxu0
    %v891 = vadd.f32 0.0, %v890
    %v892 = vpop.f32.mrf.mxu0
    %v893 = vadd.f32 0.0, %v892
    %894 = vdwg.mxu0
    %v895 = vsub.f32 %v803, 10.0
    %v896 = vsub.f32 %v809, 10.0
    %v897 = vsub.f32 %v815, 10.0
    %v898 = vsub.f32 %v821, 10.0
    %v899 = vsub.f32 %v827, 10.0
    %v900 = vsub.f32 %v833, 10.0
    %v901 = vsub.f32 %v839, 10.0
    %v902 = vsub.f32 %v845, 10.0
    %v903 = vsub.f32 %v851, 10.0
    %v904 = vsub.f32 %v857, 10.0
    %v905 = vsub.f32 %v863, 10.0
    %v906 = vsub.f32 %v869, 10.0
    %v907 = vsub.f32 %v875, 10.0
    %v908 = vsub.f32 %v881, 10.0
    %v909 = vsub.f32 %v887, 10.0
    %v910 = vsub.f32 %v893, 10.0
    %v911 = vsub.f32 %v801, 10.0
    %v912 = vsub.f32 %v807, 10.0
    %v913 = vsub.f32 %v813, 10.0
    %v914 = vsub.f32 %v819, 10.0
    %v915 = vsub.f32 %v825, 10.0
    %v916 = vsub.f32 %v831, 10.0
    %v917 = vsub.f32 %v837, 10.0
    %v918 = vsub.f32 %v843, 10.0
    %v919 = vsub.f32 %v849, 10.0
    %v920 = vsub.f32 %v855, 10.0
    %v921 = vsub.f32 %v861, 10.0
    %v922 = vsub.f32 %v867, 10.0
    %v923 = vsub.f32 %v873, 10.0
    %v924 = vsub.f32 %v879, 10.0
    %v925 = vsub.f32 %v885, 10.0
    %v926 = vsub.f32 %v891, 10.0
    %v927 = vmul.f32 %v911, 1.442695
    %v928 = vpow.pop %v927
    %v929 = vmul.f32 %v912, 1.442695
    %v930 = vpow.pop %v929
    %v931 = vmul.f32 %v913, 1.442695
    %v932 = vpow.pop %v931
    %v933 = vmul.f32 %v914, 1.442695
    %v934 = vpow.pop %v933
    %v935 = vmul.f32 %v915, 1.442695
    %v936 = vpow.pop %v935
    %v937 = vmul.f32 %v916, 1.442695
    %v938 = vpow.pop %v937
    %v939 = vmul.f32 %v917, 1.442695
    %v940 = vpow.pop %v939
    %v941 = vmul.f32 %v918, 1.442695
    %v942 = vpow.pop %v941
    %v943 = vmul.f32 %v919, 1.442695
    %v944 = vpow.pop %v943
    %v945 = vmul.f32 %v920, 1.442695
    %v946 = vpow.pop %v945
    %v947 = vmul.f32 %v921, 1.442695
    %v948 = vpow.pop %v947
    %v949 = vmul.f32 %v922, 1.442695
    %v950 = vpow.pop %v949
    %v951 = vmul.f32 %v923, 1.442695
    %v952 = vpow.pop %v951
    %v953 = vmul.f32 %v924, 1.442695
    %v954 = vpow.pop %v953
    %v955 = vmul.f32 %v925, 1.442695
    %v956 = vpow.pop %v955
    %v957 = vmul.f32 %v926, 1.442695
    %v958 = vpow.pop %v957
    %v959 = vsel %vm460, %v928, 0.0
    %v960 = vsel %vm460, %v930, 0.0
    %v961 = vsel %vm460, %v932, 0.0
    %v962 = vsel %vm460, %v934, 0.0
    %v963 = vsel %vm460, %v936, 0.0
    %v964 = vsel %vm460, %v938, 0.0
    %v965 = vsel %vm460, %v940, 0.0
    %v966 = vsel %vm460, %v942, 0.0
    %v967 = vsel %vm460, %v944, 0.0
    %v968 = vsel %vm460, %v946, 0.0
    %v969 = vsel %vm460, %v948, 0.0
    %v970 = vsel %vm460, %v950, 0.0
    %v971 = vsel %vm460, %v952, 0.0
    %v972 = vsel %vm460, %v954, 0.0
    %v973 = vsel %vm460, %v956, 0.0
    %v974 = vsel %vm460, %v958, 0.0
    %975 = vadd.xlane.f32.xlu0 %v959
    %v976 = vpop.xlane.xlu0 %975
    %977 = vadd.xlane.f32.xlu0 %v960
    %v978 = vpop.xlane.xlu0 %977
    %979 = vadd.xlane.f32.xlu0 %v961
    %v980 = vpop.xlane.xlu0 %979
    %981 = vadd.xlane.f32.xlu0 %v962
    %v982 = vpop.xlane.xlu0 %981
    %983 = vadd.xlane.f32.xlu0 %v963
    %v984 = vpop.xlane.xlu0 %983
    %985 = vadd.xlane.f32.xlu0 %v964
    %v986 = vpop.xlane.xlu0 %985
    %987 = vadd.xlane.f32.xlu0 %v965
    %v988 = vpop.xlane.xlu0 %987
    %989 = vadd.xlane.f32.xlu0 %v966
    %v990 = vpop.xlane.xlu0 %989
    %991 = vadd.xlane.f32.xlu0 %v967
    %v992 = vpop.xlane.xlu0 %991
    %993 = vadd.xlane.f32.xlu0 %v968
    %v994 = vpop.xlane.xlu0 %993
    %995 = vadd.xlane.f32.xlu0 %v969
    %v996 = vpop.xlane.xlu0 %995
    %997 = vadd.xlane.f32.xlu0 %v970
    %v998 = vpop.xlane.xlu0 %997
    %999 = vadd.xlane.f32.xlu0 %v971
    %v1000 = vpop.xlane.xlu0 %999
    %1001 = vadd.xlane.f32.xlu0 %v972
    %v1002 = vpop.xlane.xlu0 %1001
    %1003 = vadd.xlane.f32.xlu0 %v973
    %v1004 = vpop.xlane.xlu0 %1003
    %1005 = vadd.xlane.f32.xlu0 %v974
    %v1006 = vpop.xlane.xlu0 %1005
    %v1007 = vmul.f32 %v895, 1.442695
    %v1008 = vpow.pop %v1007
    %v1009 = vmul.f32 %v896, 1.442695
    %v1010 = vpow.pop %v1009
    %v1011 = vmul.f32 %v897, 1.442695
    %v1012 = vpow.pop %v1011
    %v1013 = vmul.f32 %v898, 1.442695
    %v1014 = vpow.pop %v1013
    %v1015 = vmul.f32 %v899, 1.442695
    %v1016 = vpow.pop %v1015
    %v1017 = vmul.f32 %v900, 1.442695
    %v1018 = vpow.pop %v1017
    %v1019 = vmul.f32 %v901, 1.442695
    %v1020 = vpow.pop %v1019
    %v1021 = vmul.f32 %v902, 1.442695
    %v1022 = vpow.pop %v1021
    %v1023 = vmul.f32 %v903, 1.442695
    %v1024 = vpow.pop %v1023
    %v1025 = vmul.f32 %v904, 1.442695
    %v1026 = vpow.pop %v1025
    %v1027 = vmul.f32 %v905, 1.442695
    %v1028 = vpow.pop %v1027
    %v1029 = vmul.f32 %v906, 1.442695
    %v1030 = vpow.pop %v1029
    %v1031 = vmul.f32 %v907, 1.442695
    %v1032 = vpow.pop %v1031
    %v1033 = vmul.f32 %v908, 1.442695
    %v1034 = vpow.pop %v1033
    %v1035 = vmul.f32 %v909, 1.442695
    %v1036 = vpow.pop %v1035
    %v1037 = vmul.f32 %v910, 1.442695
    %v1038 = vpow.pop %v1037
    %v1039 = vadd.f32 %v1008, %v976
    %v1040 = vadd.f32 %v1010, %v978
    %v1041 = vadd.f32 %v1012, %v980
    %v1042 = vadd.f32 %v1014, %v982
    %v1043 = vadd.f32 %v1016, %v984
    %v1044 = vadd.f32 %v1018, %v986
    %v1045 = vadd.f32 %v1020, %v988
    %v1046 = vadd.f32 %v1022, %v990
    %v1047 = vadd.f32 %v1024, %v992
    %v1048 = vadd.f32 %v1026, %v994
    %v1049 = vadd.f32 %v1028, %v996
    %v1050 = vadd.f32 %v1030, %v998
    %v1051 = vadd.f32 %v1032, %v1000
    %v1052 = vadd.f32 %v1034, %v1002
    %v1053 = vadd.f32 %v1036, %v1004
    %v1054 = vadd.f32 %v1038, %v1006
    %v1055 = vlog2.pop %v1039
    %v1056 = vmul.f32 %v1055, 0.6931472
    %v1057 = vlog2.pop %v1040
    %v1058 = vmul.f32 %v1057, 0.6931472
    %v1059 = vlog2.pop %v1041
    %v1060 = vmul.f32 %v1059, 0.6931472
    %v1061 = vlog2.pop %v1042
    %v1062 = vmul.f32 %v1061, 0.6931472
    %v1063 = vlog2.pop %v1043
    %v1064 = vmul.f32 %v1063, 0.6931472
    %v1065 = vlog2.pop %v1044
    %v1066 = vmul.f32 %v1065, 0.6931472
    %v1067 = vlog2.pop %v1045
    %v1068 = vmul.f32 %v1067, 0.6931472
    %v1069 = vlog2.pop %v1046
    %v1070 = vmul.f32 %v1069, 0.6931472
    %v1071 = vlog2.pop %v1047
    %v1072 = vmul.f32 %v1071, 0.6931472
    %v1073 = vlog2.pop %v1048
    %v1074 = vmul.f32 %v1073, 0.6931472
    %v1075 = vlog2.pop %v1049
    %v1076 = vmul.f32 %v1075, 0.6931472
    %v1077 = vlog2.pop %v1050
    %v1078 = vmul.f32 %v1077, 0.6931472
    %v1079 = vlog2.pop %v1051
    %v1080 = vmul.f32 %v1079, 0.6931472
    %v1081 = vlog2.pop %v1052
    %v1082 = vmul.f32 %v1081, 0.6931472
    %v1083 = vlog2.pop %v1053
    %v1084 = vmul.f32 %v1083, 0.6931472
    %v1085 = vlog2.pop %v1054
    %v1086 = vmul.f32 %v1085, 0.6931472
    %v1087 = vsub.f32 %v895, %v1056
    %v1088 = vsub.f32 %v896, %v1058
    %v1089 = vsub.f32 %v897, %v1060
    %v1090 = vsub.f32 %v898, %v1062
    %v1091 = vsub.f32 %v899, %v1064
    %v1092 = vsub.f32 %v900, %v1066
    %v1093 = vsub.f32 %v901, %v1068
    %v1094 = vsub.f32 %v902, %v1070
    %v1095 = vsub.f32 %v903, %v1072
    %v1096 = vsub.f32 %v904, %v1074
    %v1097 = vsub.f32 %v905, %v1076
    %v1098 = vsub.f32 %v906, %v1078
    %v1099 = vsub.f32 %v907, %v1080
    %v1100 = vsub.f32 %v908, %v1082
    %v1101 = vsub.f32 %v909, %v1084
    %v1102 = vsub.f32 %v910, %v1086
    %v1103 = vsel %vm460, %v1087, 0.0
    %v1104 = vsel %vm460, %v1088, 0.0
    %v1105 = vsel %vm460, %v1089, 0.0
    %v1106 = vsel %vm460, %v1090, 0.0
    %v1107 = vsel %vm460, %v1091, 0.0
    %v1108 = vsel %vm460, %v1092, 0.0
    %v1109 = vsel %vm460, %v1093, 0.0
    %v1110 = vsel %vm460, %v1094, 0.0
    %v1111 = vsel %vm460, %v1095, 0.0
    %v1112 = vsel %vm460, %v1096, 0.0
    %v1113 = vsel %vm460, %v1097, 0.0
    %v1114 = vsel %vm460, %v1098, 0.0
    %v1115 = vsel %vm460, %v1099, 0.0
    %v1116 = vsel %vm460, %v1100, 0.0
    %v1117 = vsel %vm460, %v1101, 0.0
    %v1118 = vsel %vm460, %v1102, 0.0
    %1119 = vadd.xlane.f32.xlu0 %v1103
    %v1120 = vpop.xlane.xlu0 %1119
    %1121 = vadd.xlane.f32.xlu0 %v1104
    %v1122 = vpop.xlane.xlu0 %1121
    %1123 = vadd.xlane.f32.xlu0 %v1105
    %v1124 = vpop.xlane.xlu0 %1123
    %1125 = vadd.xlane.f32.xlu0 %v1106
    %v1126 = vpop.xlane.xlu0 %1125
    %1127 = vadd.xlane.f32.xlu0 %v1107
    %v1128 = vpop.xlane.xlu0 %1127
    %1129 = vadd.xlane.f32.xlu0 %v1108
    %v1130 = vpop.xlane.xlu0 %1129
    %1131 = vadd.xlane.f32.xlu0 %v1109
    %v1132 = vpop.xlane.xlu0 %1131
    %1133 = vadd.xlane.f32.xlu0 %v1110
    %v1134 = vpop.xlane.xlu0 %1133
    %1135 = vadd.xlane.f32.xlu0 %v1111
    %v1136 = vpop.xlane.xlu0 %1135
    %1137 = vadd.xlane.f32.xlu0 %v1112
    %v1138 = vpop.xlane.xlu0 %1137
    %1139 = vadd.xlane.f32.xlu0 %v1113
    %v1140 = vpop.xlane.xlu0 %1139
    %1141 = vadd.xlane.f32.xlu0 %v1114
    %v1142 = vpop.xlane.xlu0 %1141
    %1143 = vadd.xlane.f32.xlu0 %v1115
    %v1144 = vpop.xlane.xlu0 %1143
    %1145 = vadd.xlane.f32.xlu0 %v1116
    %v1146 = vpop.xlane.xlu0 %1145
    %1147 = vadd.xlane.f32.xlu0 %v1117
    %v1148 = vpop.xlane.xlu0 %1147
    %1149 = vadd.xlane.f32.xlu0 %v1118
    %v1150 = vpop.xlane.xlu0 %1149
    %vm1151 = vcmp.lt.s32.totalorder %v638, 100
    %vm1152 = vcmp.lt.s32.totalorder %v639, 100
    %vm1153 = vcmp.lt.s32.totalorder %v640, 100
    %vm1154 = vcmp.lt.s32.totalorder %v641, 100
    %vm1155 = vcmp.lt.s32.totalorder %v642, 100
    %vm1156 = vcmp.lt.s32.totalorder %v643, 100
    %vm1157 = vcmp.lt.s32.totalorder %v644, 100
    %vm1158 = vcmp.lt.s32.totalorder %v645, 100
    %vm1159 = vcmp.lt.s32.totalorder %v646, 100
    %vm1160 = vcmp.lt.s32.totalorder %v647, 100
    %vm1161 = vcmp.lt.s32.totalorder %v648, 100
    %vm1162 = vcmp.lt.s32.totalorder %v649, 100
    %vm1163 = vcmp.lt.s32.totalorder %v650, 100
    %vm1164 = vcmp.lt.s32.totalorder %v651, 100
    %vm1165 = vcmp.lt.s32.totalorder %v652, 100
    %vm1166 = vcmp.lt.s32.totalorder %v653, 100
    %v1167 = vsel %vm1151, %v703, 0.0
    %v1168 = vsel %vm1152, %v705, 0.0
    %v1169 = vsel %vm1153, %v707, 0.0
    %v1170 = vsel %vm1154, %v709, 0.0
    %v1171 = vsel %vm1155, %v711, 0.0
    %v1172 = vsel %vm1156, %v713, 0.0
    %v1173 = vsel %vm1157, %v715, 0.0
    %v1174 = vsel %vm1158, %v717, 0.0
    %v1175 = vsel %vm1159, %v719, 0.0
    %v1176 = vsel %vm1160, %v721, 0.0
    %v1177 = vsel %vm1161, %v723, 0.0
    %v1178 = vsel %vm1162, %v725, 0.0
    %v1179 = vsel %vm1163, %v727, 0.0
    %v1180 = vsel %vm1164, %v729, 0.0
    %v1181 = vsel %vm1165, %v731, 0.0
    %v1182 = vsel %vm1166, %v733, 0.0
    %vm1183 = vcmask 7168
    %v1184 = vsel %vm1183, %v1167, 0.0
    %v1185 = vsel %vm1183, %v1168, 0.0
    %v1186 = vadd.f32 %v1184, %v1185
    %v1187 = vsel %vm1183, %v1169, 0.0
    %v1188 = vadd.f32 %v1186, %v1187
    %v1189 = vsel %vm1183, %v1170, 0.0
    %v1190 = vadd.f32 %v1188, %v1189
    %v1191 = vsel %vm1183, %v1171, 0.0
    %v1192 = vadd.f32 %v1190, %v1191
    %v1193 = vsel %vm1183, %v1172, 0.0
    %v1194 = vadd.f32 %v1192, %v1193
    %v1195 = vsel %vm1183, %v1173, 0.0
    %v1196 = vadd.f32 %v1194, %v1195
    %v1197 = vsel %vm1183, %v1174, 0.0
    %v1198 = vadd.f32 %v1196, %v1197
    %v1199 = vsel %vm1183, %v1175, 0.0
    %v1200 = vadd.f32 %v1198, %v1199
    %v1201 = vsel %vm1183, %v1176, 0.0
    %v1202 = vadd.f32 %v1200, %v1201
    %v1203 = vsel %vm1183, %v1177, 0.0
    %v1204 = vadd.f32 %v1202, %v1203
    %v1205 = vsel %vm1183, %v1178, 0.0
    %v1206 = vadd.f32 %v1204, %v1205
    %v1207 = vsel %vm1183, %v1179, 0.0
    %v1208 = vadd.f32 %v1206, %v1207
    %v1209 = vsel %vm1183, %v1180, 0.0
    %v1210 = vadd.f32 %v1208, %v1209
    %v1211 = vsel %vm1183, %v1181, 0.0
    %v1212 = vadd.f32 %v1210, %v1211
    %v1213 = vsel %vm1183, %v1182, 0.0
    %v1214 = vadd.f32 %v1212, %v1213
    %1215 = vadd.xlane.f32.xlu0 %v1214
    %v1216 = vpop.xlane.xlu0 %1215
    %v1217 = vrot.slane %v1216, 4
    %v1218 = vadd.f32 %v1216, %v1217
    %v1219 = vrot.slane %v1218, 2
    %v1220 = vadd.f32 %v1218, %v1219
    %v1221 = vrot.slane %v1220, 1
    %v1222 = vadd.f32 %v1220, %v1221
    %s1223 = vtos %v1222
    %s1224 = smul.f32 %s1223, 0.01010101
    %v1225 = vsel %vm1151, %v1120, 0.0
    %v1226 = vsel %vm1152, %v1122, 0.0
    %v1227 = vsel %vm1153, %v1124, 0.0
    %v1228 = vsel %vm1154, %v1126, 0.0
    %v1229 = vsel %vm1155, %v1128, 0.0
    %v1230 = vsel %vm1156, %v1130, 0.0
    %v1231 = vsel %vm1157, %v1132, 0.0
    %v1232 = vsel %vm1158, %v1134, 0.0
    %v1233 = vsel %vm1159, %v1136, 0.0
    %v1234 = vsel %vm1160, %v1138, 0.0
    %v1235 = vsel %vm1161, %v1140, 0.0
    %v1236 = vsel %vm1162, %v1142, 0.0
    %v1237 = vsel %vm1163, %v1144, 0.0
    %v1238 = vsel %vm1164, %v1146, 0.0
    %v1239 = vsel %vm1165, %v1148, 0.0
    %v1240 = vsel %vm1166, %v1150, 0.0
    %v1241 = vsel %vm1183, %v1225, 0.0
    %v1242 = vsel %vm1183, %v1226, 0.0
    %v1243 = vadd.f32 %v1241, %v1242
    %v1244 = vsel %vm1183, %v1227, 0.0
    %v1245 = vadd.f32 %v1243, %v1244
    %v1246 = vsel %vm1183, %v1228, 0.0
    %v1247 = vadd.f32 %v1245, %v1246
    %v1248 = vsel %vm1183, %v1229, 0.0
    %v1249 = vadd.f32 %v1247, %v1248
    %v1250 = vsel %vm1183, %v1230, 0.0
    %v1251 = vadd.f32 %v1249, %v1250
    %v1252 = vsel %vm1183, %v1231, 0.0
    %v1253 = vadd.f32 %v1251, %v1252
    %v1254 = vsel %vm1183, %v1232, 0.0
    %v1255 = vadd.f32 %v1253, %v1254
    %v1256 = vsel %vm1183, %v1233, 0.0
    %v1257 = vadd.f32 %v1255, %v1256
    %v1258 = vsel %vm1183, %v1234, 0.0
    %v1259 = vadd.f32 %v1257, %v1258
    %v1260 = vsel %vm1183, %v1235, 0.0
    %v1261 = vadd.f32 %v1259, %v1260
    %v1262 = vsel %vm1183, %v1236, 0.0
    %v1263 = vadd.f32 %v1261, %v1262
    %v1264 = vsel %vm1183, %v1237, 0.0
    %v1265 = vadd.f32 %v1263, %v1264
    %v1266 = vsel %vm1183, %v1238, 0.0
    %v1267 = vadd.f32 %v1265, %v1266
    %v1268 = vsel %vm1183, %v1239, 0.0
    %v1269 = vadd.f32 %v1267, %v1268
    %v1270 = vsel %vm1183, %v1240, 0.0
    %v1271 = vadd.f32 %v1269, %v1270
    %1272 = vadd.xlane.f32.xlu0 %v1271
    %v1273 = vpop.xlane.xlu0 %1272
    %v1274 = vrot.slane %v1273, 4
    %v1275 = vadd.f32 %v1273, %v1274
    %v1276 = vrot.slane %v1275, 2
    %v1277 = vadd.f32 %v1275, %v1276
    %v1278 = vrot.slane %v1277, 1
    %v1279 = vadd.f32 %v1277, %v1278
    %s1280 = vtos %v1279
    %s1281 = smul.f32 %s1280, 0.01
    %s1282 = sadd.f32 %s1224, %s1281
    %s1283 = smul.f32 %s1282, -0.00025
    %s1284 = scalar_lea.smem [#allocation2], 0
    %1285 = sst [smem:[%s1284]] %s1283
    // Predicated region
    $region6: #{pixel_contrast_loss.1} parent=1 // pred_check
      _
    $region7: #{pixel_contrast_loss.1} parent=1 // pred_check_branch
      %1287 = sbr.rel (0) target = $region9
    $region8: #{pixel_contrast_loss.1} parent=1 // pred_region
      %s1289 = ssub.s32 16, 16
      %1290 = vsyncadd [#allocation3], %s1289
      %1293 = dma.smem_to_hbm [#allocation2], 16, %s1, [#allocation3]
    $region9: #{pixel_contrast_loss.1} parent=1 // pred_fallthru
      _
    // Predicated region
    $region10: #{pixel_contrast_loss.1} parent=1 // pred_check
      _
    $region11: #{pixel_contrast_loss.1} parent=1 // pred_check_branch
      %1295 = sbr.rel (0) target = $region13
    $region12: #{pixel_contrast_loss.1} parent=1 // pred_region
      %1296 = dma.done [#allocation3], 16
    $region13: #{pixel_contrast_loss.1} parent=1 // pred_fallthru
      _
    %1297 = sfence
    %1298 = vsyncpa [#allocation3], 1

</llo_original>
